<compile_context>
chip_gen: v7x
topology: tpu7x:2x2x1
jax: 0.10.0
libtpu: 0.0.40
codegen_flags: <defaults>
</compile_context>

<pallas_src>
import jax
import jax.numpy as jnp
from jax import lax
from jax.experimental import pallas as pl
from jax.experimental.pallas import tpu as pltpu

N_SINGLE = 4          # identity, square, sin, sigmoid
N_DOUBLE = 1          # product
N_FUNCS = N_SINGLE + N_DOUBLE          # 5
FUNC_IN_DIM = N_FUNCS + N_DOUBLE       # 6


def symbolic_layer_kernel(x_ref, w_ref, b_ref, o_ref):
    # g = W @ x_tile^T + b -> (FUNC_IN_DIM, bm); batch sits on the lane axis.
    # x_ref is the natural-layout (bm, in_dim) tile; contract both last dims.
    g = lax.dot_general(
        w_ref[...], x_ref[...],
        dimension_numbers=(((1,), (1,)), ((), ())),
        preferred_element_type=jnp.float32,
    ) + b_ref[...]

    dt = o_ref.dtype
    # Single-input activation units: one sublane row each, full lane width,
    # stored directly into the lane-dense output block.
    o_ref[0:1, :] = g[0:1, :].astype(dt)                             # identity
    o_ref[1:2, :] = (g[1:2, :] * g[1:2, :]).astype(dt)               # square
    o_ref[2:3, :] = jnp.sin(g[2:3, :]).astype(dt)                    # sin
    # Exact sigmoid (exp goes to the EUP slot, which has huge slack here).
    o_ref[3:4, :] = (1.0 / (1.0 + jnp.exp(-g[3:4, :]))).astype(dt)   # sigmoid
    # Double-input activation unit: two consecutive rows of g.
    o_ref[4:5, :] = (g[4:5, :] * g[5:6, :]).astype(dt)               # product


def symbolic_layer(x, w, b, *, bm=4096):
    """x: (B, in_dim); w: (FUNC_IN_DIM, in_dim) [torch Linear layout]; b: (FUNC_IN_DIM,)."""
    B, in_dim = x.shape
    dt = x.dtype

    # Batch tile: multiple of 128, capped at `bm`, and clamped so the grid
    # keeps >=2 steps whenever B > 128 (keeps both v7x TensorCores busy while
    # amortizing per-grid-step overhead for large B).  No padding: the grid
    # over-covers B and Pallas boundary blocks mask the ragged tail.
    bm = max(128, min(bm, pl.cdiv(B, 2 * 128) * 128))
    grid = pl.cdiv(B, bm)

    w_c = w.astype(dt)                               # matmul operands in x's dtype
    b2 = b.astype(jnp.float32).reshape(FUNC_IN_DIM, 1)

    out_t = pl.pallas_call(
        symbolic_layer_kernel,
        out_shape=jax.ShapeDtypeStruct((N_FUNCS, B), dt),
        grid_spec=pl.GridSpec(
            grid=(grid,),
            in_specs=[
                pl.BlockSpec((bm, in_dim), lambda i: (i, 0)),            # x natural layout
                pl.BlockSpec((FUNC_IN_DIM, in_dim), lambda i: (0, 0)),   # W resident
                pl.BlockSpec((FUNC_IN_DIM, 1), lambda i: (0, 0)),        # bias resident
            ],
            out_specs=pl.BlockSpec((N_FUNCS, bm), lambda i: (0, i)),     # lane-dense out
        ),
        compiler_params=pltpu.CompilerParams(
            dimension_semantics=("parallel",),       # shard batch tiles across TCs (v7x)
            vmem_limit_bytes=32 << 20,               # headroom if bm is raised; valid on v5e/v6e/v7x
        ),
    )(x, w_c, b2)

    return out_t.T                                   # (B, N_FUNCS) — small glue transpose


def symbolic_layer_ref(x, w, b):
    """Pure-JAX f32 reference mirroring the PyTorch forward exactly."""
    g = x.astype(jnp.float32) @ w.T.astype(jnp.float32) + b.astype(jnp.float32)
    outs = [
        g[:, 0],                    # identity
        g[:, 1] ** 2,               # square
        jnp.sin(g[:, 2]),           # sin
        jax.nn.sigmoid(g[:, 3]),    # sigmoid
        g[:, 4] * g[:, 5],          # product (double-input)
    ]
    return jnp.stack(outs, axis=1)


if __name__ == "__main__":
    key = jax.random.PRNGKey(0)
    kx, kw, kb = jax.random.split(key, 3)

    batch, in_dim = 300, 16         # non-multiple of the tile -> exercises boundary masking; grid = 2
    x = jax.random.normal(kx, (batch, in_dim), dtype=jnp.float32)
    # nn.Linear(in_dim, func_in_dim): weight (func_in_dim, in_dim), bias (func_in_dim,)
    w = 0.1 * jax.random.normal(kw, (FUNC_IN_DIM, in_dim), dtype=jnp.float32)
    b = 0.1 * jax.random.normal(kb, (FUNC_IN_DIM,), dtype=jnp.float32)

    ref = symbolic_layer_ref(x, w, b)

    # f32 path (multi-tile grid + ragged tail handled by boundary masking, no pad)
    out = jax.block_until_ready(symbolic_layer(x, w, b))
    assert out.shape == (batch, N_FUNCS)
    assert jnp.allclose(out, ref, atol=1e-5, rtol=1e-5)

    # bf16 I/O path (halves HBM bytes; f32 accumulation/activations inside the kernel).
    # Note: W is also cast to bf16 -> weight quantization; square/product amplify rounding.
    out_bf16 = jax.block_until_ready(symbolic_layer(x.astype(jnp.bfloat16), w, b))
    assert out_bf16.shape == (batch, N_FUNCS)
    assert jnp.allclose(out_bf16.astype(jnp.float32), ref, atol=5e-2, rtol=5e-2)

    # tiny-batch path (B < 128 -> single masked tile)
    out_small = jax.block_until_ready(symbolic_layer(x[:8], w, b))
    assert jnp.allclose(out_small, ref[:8], atol=1e-5, rtol=1e-5)

    print("KERNEL_OK")
</pallas_src>

<mosaic_0001>
module attributes {stable_mosaic.version = 11 : i64} {
  func.func @symbolic_layer_kernel(%arg0: i32, %arg1: memref<256x16xf32, #tpu.memory_space<vmem>>, %arg2: memref<6x16xf32, #tpu.memory_space<vmem>>, %arg3: memref<6x1xf32, #tpu.memory_space<vmem>>, %arg4: memref<5x256xf32, #tpu.memory_space<vmem>>) attributes {dimension_semantics = [#tpu.dimension_semantics<parallel>], iteration_bounds = array<i64: 2>, scalar_prefetch = 0 : i64, scratch_operands = 0 : i64, tpu.core_type = #tpu.core_type<tc>, window_params = [{transform_indices = @transform_0, window_bounds = array<i64: 256, 16>}, {pipeline_mode = #tpu.pipeline_mode<synchronous>, transform_indices = @transform_1, window_bounds = array<i64: 6, 16>}, {pipeline_mode = #tpu.pipeline_mode<synchronous>, transform_indices = @transform_2, window_bounds = array<i64: 6, 1>}, {transform_indices = @transform_3, window_bounds = array<i64: 5, 256>}]} {
    %c0 = arith.constant 0 : index
    %c0_0 = arith.constant 0 : index
    %0 = vector.load %arg2[%c0, %c0_0] : memref<6x16xf32, #tpu.memory_space<vmem>>, vector<6x16xf32>
    %c0_1 = arith.constant 0 : index
    %c0_2 = arith.constant 0 : index
    %1 = vector.load %arg1[%c0_1, %c0_2] : memref<256x16xf32, #tpu.memory_space<vmem>>, vector<256x16xf32>
    %cst = arith.constant dense<0.000000e+00> : vector<6x256xf32>
    %2 = tpu.matmul %0, %1, %cst {dimension_numbers = #tpu.dot_dimension_numbers<[1], [1], [0], [0], [0, 0, 1, 0], [], []>} : vector<6x16xf32>, vector<256x16xf32>, vector<6x256xf32> -> vector<6x256xf32>
    %c0_3 = arith.constant 0 : index
    %c0_4 = arith.constant 0 : index
    %3 = vector.load %arg3[%c0_3, %c0_4] : memref<6x1xf32, #tpu.memory_space<vmem>>, vector<6x1xf32>
    %4 = vector.broadcast %3 : vector<6x1xf32> to vector<6x256xf32>
    %5 = arith.addf %2, %4 : vector<6x256xf32>
    %6 = vector.extract_strided_slice %5 {offsets = [0, 0], sizes = [1, 256], strides = [1, 1]} : vector<6x256xf32> to vector<1x256xf32>
    %c0_5 = arith.constant 0 : index
    %c0_6 = arith.constant 0 : index
    %7 = vector.load %arg4[%c0_5, %c0_6] : memref<5x256xf32, #tpu.memory_space<vmem>>, vector<1x256xf32>
    tpu.vector_store %arg4[%c0_5, %c0_6], %6 {strides = array<i32>} : memref<5x256xf32, #tpu.memory_space<vmem>>, vector<1x256xf32>,
    %8 = vector.extract_strided_slice %5 {offsets = [1, 0], sizes = [1, 256], strides = [1, 1]} : vector<6x256xf32> to vector<1x256xf32>
    %9 = vector.extract_strided_slice %5 {offsets = [1, 0], sizes = [1, 256], strides = [1, 1]} : vector<6x256xf32> to vector<1x256xf32>
    %10 = arith.mulf %8, %9 : vector<1x256xf32>
    %c1 = arith.constant 1 : index
    %c0_7 = arith.constant 0 : index
    %11 = vector.load %arg4[%c1, %c0_7] : memref<5x256xf32, #tpu.memory_space<vmem>>, vector<1x256xf32>
    tpu.vector_store %arg4[%c1, %c0_7], %10 {strides = array<i32>} : memref<5x256xf32, #tpu.memory_space<vmem>>, vector<1x256xf32>,
    %12 = vector.extract_strided_slice %5 {offsets = [2, 0], sizes = [1, 256], strides = [1, 1]} : vector<6x256xf32> to vector<1x256xf32>
    %13 = math.sin %12 : vector<1x256xf32>
    %c2 = arith.constant 2 : index
    %c0_8 = arith.constant 0 : index
    %14 = vector.load %arg4[%c2, %c0_8] : memref<5x256xf32, #tpu.memory_space<vmem>>, vector<1x256xf32>
    tpu.vector_store %arg4[%c2, %c0_8], %13 {strides = array<i32>} : memref<5x256xf32, #tpu.memory_space<vmem>>, vector<1x256xf32>,
    %15 = vector.extract_strided_slice %5 {offsets = [3, 0], sizes = [1, 256], strides = [1, 1]} : vector<6x256xf32> to vector<1x256xf32>
    %cst_9 = arith.constant 0.000000e+00 : f32
    %16 = vector.broadcast %cst_9 : f32 to vector<1x256xf32>
    %17 = arith.subf %16, %15 : vector<1x256xf32>
    %18 = math.exp %17 : vector<1x256xf32>
    %cst_10 = arith.constant 1.000000e+00 : f32
    %19 = vector.broadcast %cst_10 : f32 to vector<1x256xf32>
    %20 = arith.addf %19, %18 : vector<1x256xf32>
    %cst_11 = arith.constant 1.000000e+00 : f32
    %21 = vector.broadcast %cst_11 : f32 to vector<1x256xf32>
    %22 = arith.divf %21, %20 : vector<1x256xf32>
    %c3 = arith.constant 3 : index
    %c0_12 = arith.constant 0 : index
    %23 = vector.load %arg4[%c3, %c0_12] : memref<5x256xf32, #tpu.memory_space<vmem>>, vector<1x256xf32>
    tpu.vector_store %arg4[%c3, %c0_12], %22 {strides = array<i32>} : memref<5x256xf32, #tpu.memory_space<vmem>>, vector<1x256xf32>,
    %24 = vector.extract_strided_slice %5 {offsets = [4, 0], sizes = [1, 256], strides = [1, 1]} : vector<6x256xf32> to vector<1x256xf32>
    %25 = vector.extract_strided_slice %5 {offsets = [5, 0], sizes = [1, 256], strides = [1, 1]} : vector<6x256xf32> to vector<1x256xf32>
    %26 = arith.mulf %24, %25 : vector<1x256xf32>
    %c4 = arith.constant 4 : index
    %c0_13 = arith.constant 0 : index
    %27 = vector.load %arg4[%c4, %c0_13] : memref<5x256xf32, #tpu.memory_space<vmem>>, vector<1x256xf32>
    tpu.vector_store %arg4[%c4, %c0_13], %26 {strides = array<i32>} : memref<5x256xf32, #tpu.memory_space<vmem>>, vector<1x256xf32>,
    return
  }
  func.func @transform_0(%arg0: i32) -> (i32, i32) {
    %c0_i32 = arith.constant 0 : i32
    %c0_i32_0 = arith.constant 0 : i32
    return %arg0, %c0_i32 : i32, i32
  }
  func.func @transform_1(%arg0: i32) -> (i32, i32) {
    %c0_i32 = arith.constant 0 : i32
    %c0_i32_0 = arith.constant 0 : i32
    %c0_i32_1 = arith.constant 0 : i32
    return %c0_i32, %c0_i32_0 : i32, i32
  }
  func.func @transform_2(%arg0: i32) -> (i32, i32) {
    %c0_i32 = arith.constant 0 : i32
    %c0_i32_0 = arith.constant 0 : i32
    %c0_i32_1 = arith.constant 0 : i32
    return %c0_i32, %c0_i32_0 : i32, i32
  }
  func.func @transform_3(%arg0: i32) -> (i32, i32) {
    %c0_i32 = arith.constant 0 : i32
    %c0_i32_0 = arith.constant 0 : i32
    return %c0_i32, %arg0 : i32, i32
  }
}

</mosaic_0001>

<llo_original>
// kernel: tpu_custom_call.1
$region0: #{tpu_custom_call.1}
  #allocation0 [shape = 'u32[]', space=smem, size = 0x4, offset = 0x4, fixed_abs, tag = 'smem constant byte address 0x4 - core index']
  #allocation1 [shape = 'u32[144,128]{1,0:T(1,128)}', space=vmem, size = 0x12000, scoped, tag = 'internal scratch']
  %s0 = inlined_call_operand.vmem [shape: f32[300,16], index: 0, kind: input, shape index: {}]
  %s1 = inlined_call_operand.vmem [shape: f32[6,16], index: 1, kind: input, shape index: {}]
  %s2 = inlined_call_operand.vmem [shape: f32[6,1], index: 2, kind: input, shape index: {}]
  %s3 = inlined_call_operand.hbm [shape: f32[5,300], index: 3, kind: output, shape index: {}]
  %s4 = sld [smem:[#allocation0]]
  $region45: #{tpu_custom_call.1} parent=0
    _
  %s6 = ssub.s32 1, %s4
  %s7 = scalar_select 0, %s6, %s4
  $region1: #{tpu_custom_call.1} parent=0
    #allocation2 [shape = 'u8[16384]{0}', space=vmem, size = 0x4000, scoped, tag = 'output window, operand 0']
    #allocation3 [shape = 's32[2]{0}', space=sflag, size = 0x8, scoped, tag = 'scoped memory for tpu_custom_call.1']
    %8 = vsyncpa [#allocation3], 0
    %s9 = scalar_lea.sflag [#allocation3], 1
    %10 = vsyncpa %s9, 0
    loop: start=0, step=1, limit=4
    $region2: #{tpu_custom_call.1} parent=1 // loop_pre_header
      _
    $region3: #{tpu_custom_call.1} parent=1 // loop_header
      %s12 = sphi 0, %s16
      %p13 = scmp.ge.s32.totalorder %s12, 4
      %s22 = sphi 0, %s24
      %s25 = sphi 0, %s22
      %s26 = sphi 0, %s25
      %s42 = sphi 0, %s26
      %s46 = sphi 0, %s46
      %s48 = sphi 0, %s46
      %s49 = sphi 0, %s48
      %s63 = sphi 0, %s49
      %s67 = sphi 0, %s67
      %s69 = sphi 0, %s67
      %s70 = sphi 0, %s69
      %s84 = sphi 0, %s70
      %s90 = sphi 0, %s92
      %s93 = sphi 0, %s90
      %s94 = sphi 0, %s93
      %s110 = sphi 0, %s94
    $region4: #{tpu_custom_call.1} parent=1 // loop_header_branch
      %15 = sbr.rel (%p13) target = $region8
    $region5: #{tpu_custom_call.1} parent=1 // loop_body
      %s17 = ssub.s32 %s12, 1
      %s18 = ssub.s32 %s12, 2
      %s19 = sadd.s32 %s12, 1
      %s20 = ssub.s32 %s12, %s19
      %p21 = scmp.eq.s32.totalorder %s20, 0
      %s23 = sadd.s32 %s22, 1
      %s24 = scalar_select %p21, %s22, %s23
      %p27 = pneg %p21
      %p28 = scmp.eq.s32.totalorder %s12, 1
      %p29 = por %p27, %p28
      %p30 = scmp.ne.s32.totalorder %s22, %s25
      %p31 = scmp.eq.s32.totalorder %s12, 0
      %p32 = por %p30, %p31
      %p33 = scmp.ne.s32.totalorder %s22, %s25
      %p34 = scmp.eq.s32.totalorder %s17, 1
      %p35 = por %p33, %p34
      %p36 = scmp.ne.s32.totalorder %s25, %s26
      %p37 = scmp.eq.s32.totalorder %s17, 0
      %p38 = por %p36, %p37
      %p39 = scmp.ne.s32.totalorder %s25, %s26
      %p40 = scmp.eq.s32.totalorder %s18, 1
      %p41 = por %p39, %p40
      %p43 = scmp.ne.s32.totalorder %s26, %s42
      %p44 = scmp.eq.s32.totalorder %s18, 0
      %p45 = por %p43, %p44
      %s47 = sadd.s32 %s46, 1
      %p50 = scmp.eq.s32.totalorder %s12, 1
      %p51 = scmp.ne.s32.totalorder %s46, %s48
      %p52 = scmp.eq.s32.totalorder %s12, 0
      %p53 = por %p51, %p52
      %p54 = scmp.ne.s32.totalorder %s46, %s48
      %p55 = scmp.eq.s32.totalorder %s17, 1
      %p56 = por %p54, %p55
      %p57 = scmp.ne.s32.totalorder %s48, %s49
      %p58 = scmp.eq.s32.totalorder %s17, 0
      %p59 = por %p57, %p58
      %p60 = scmp.ne.s32.totalorder %s48, %s49
      %p61 = scmp.eq.s32.totalorder %s18, 1
      %p62 = por %p60, %p61
      %p64 = scmp.ne.s32.totalorder %s49, %s63
      %p65 = scmp.eq.s32.totalorder %s18, 0
      %p66 = por %p64, %p65
      %s68 = sadd.s32 %s67, 1
      %p71 = scmp.eq.s32.totalorder %s12, 1
      %p72 = scmp.ne.s32.totalorder %s67, %s69
      %p73 = scmp.eq.s32.totalorder %s12, 0
      %p74 = por %p72, %p73
      %p75 = scmp.ne.s32.totalorder %s67, %s69
      %p76 = scmp.eq.s32.totalorder %s17, 1
      %p77 = por %p75, %p76
      %p78 = scmp.ne.s32.totalorder %s69, %s70
      %p79 = scmp.eq.s32.totalorder %s17, 0
      %p80 = por %p78, %p79
      %p81 = scmp.ne.s32.totalorder %s69, %s70
      %p82 = scmp.eq.s32.totalorder %s18, 1
      %p83 = por %p81, %p82
      %p85 = scmp.ne.s32.totalorder %s70, %s84
      %p86 = scmp.eq.s32.totalorder %s18, 0
      %p87 = por %p85, %p86
      %s88 = ssub.s32 %s12, %s19
      %p89 = scmp.eq.s32.totalorder %s88, 0
      %s91 = sadd.s32 %s90, 1
      %s92 = scalar_select %p89, %s90, %s91
      %p95 = pneg %p89
      %p96 = scmp.eq.s32.totalorder %s12, 1
      %p97 = por %p95, %p96
      %p98 = scmp.ne.s32.totalorder %s90, %s93
      %p99 = scmp.eq.s32.totalorder %s12, 0
      %p100 = por %p98, %p99
      %p101 = scmp.ne.s32.totalorder %s90, %s93
      %p102 = scmp.eq.s32.totalorder %s17, 1
      %p103 = por %p101, %p102
      %p104 = scmp.ne.s32.totalorder %s93, %s94
      %p105 = scmp.eq.s32.totalorder %s17, 0
      %p106 = por %p104, %p105
      %p107 = scmp.ne.s32.totalorder %s93, %s94
      %p108 = scmp.eq.s32.totalorder %s18, 1
      %p109 = por %p107, %p108
      %p111 = scmp.ne.s32.totalorder %s94, %s110
      %p112 = scmp.eq.s32.totalorder %s18, 0
      %p113 = por %p111, %p112
      %p114 = scmp.le.s32.totalorder 1, %s12
      %p115 = scmp.lt.s32.totalorder %s12, 3
      %p116 = pnand %p114, %p115
      %p117 = pneg %p116
      // Predicated region
      $region9: #{tpu_custom_call.1} parent=5 // pred_check
        _
      $region10: #{tpu_custom_call.1} parent=5 // pred_check_branch
        %119 = sbr.rel (%p116) target = $region12
      $region11: #{tpu_custom_call.1} parent=5 // pred_region
        %s120 = ssub.s32 %s12, 1
        // Predicated region
        $region13: #{tpu_custom_call.1} parent=11 // pred_check
          %p121 = pneg %p59
        $region14: #{tpu_custom_call.1} parent=11 // pred_check_branch
          %123 = sbr.rel (%p121) target = $region16
        $region15: #{tpu_custom_call.1} parent=11 // pred_region
          _
        $region16: #{tpu_custom_call.1} parent=11 // pred_fallthru
          _
        // Predicated region
        $region17: #{tpu_custom_call.1} parent=11 // pred_check
          %p124 = pneg %p80
        $region18: #{tpu_custom_call.1} parent=11 // pred_check_branch
          %126 = sbr.rel (%p124) target = $region20
        $region19: #{tpu_custom_call.1} parent=11 // pred_region
          _
        $region20: #{tpu_custom_call.1} parent=11 // pred_fallthru
          _
      $region12: #{tpu_custom_call.1} parent=5 // pred_fallthru
        _
      %p127 = scmp.lt.s32.totalorder %s12, 2
      // Predicated region
      $region21: #{tpu_custom_call.1} parent=5 // pred_check
        %p128 = pneg %p127
      $region22: #{tpu_custom_call.1} parent=5 // pred_check_branch
        %130 = sbr.rel (%p128) target = $region24
      $region23: #{tpu_custom_call.1} parent=5 // pred_region
        // Predicated region
        $region25: #{tpu_custom_call.1} parent=23 // pred_check
          %p131 = pneg %p32
        $region26: #{tpu_custom_call.1} parent=23 // pred_check_branch
          %133 = sbr.rel (%p131) target = $region28
        $region27: #{tpu_custom_call.1} parent=23 // pred_region
          %s134 = smul.u32 32, %s12
          %s135 = ssub.s32 38, %s134
          %p136 = scmp.lt.s32.totalorder %s135, 32
          %s137 = scalar_select %p136, %s135, 32
          %s138 = smul.u32 128, %s137
          %p139 = scmp.lt.s32.totalorder %s134, 37
          %s140 = scalar_select %p139, %s134, 37
          %s141 = smul.addr %s140, 8
          %s142 = scalar_lea.vmem %s0, %s141
          %s143 = smul.u32 32, %s12
          %s144 = ssub.s32 38, %s143
          %p145 = scmp.lt.s32.totalorder %s144, 32
          %s146 = scalar_select %p145, %s144, 32
          %s147 = smul.u32 128, %s146
        $region28: #{tpu_custom_call.1} parent=23 // pred_fallthru
          _
      $region24: #{tpu_custom_call.1} parent=5 // pred_fallthru
        _
      %p148 = scmp.le.s32.totalorder 1, %s12
      %p149 = scmp.lt.s32.totalorder %s12, 3
      %p150 = pnand %p148, %p149
      %p151 = pneg %p150
      // Predicated region
      $region29: #{tpu_custom_call.1} parent=5 // pred_check
        _
      $region30: #{tpu_custom_call.1} parent=5 // pred_check_branch
        %153 = sbr.rel (%p150) target = $region32
      $region31: #{tpu_custom_call.1} parent=5 // pred_region
        %s154 = ssub.s32 %s12, 1
        %s155 = smul.u32 32, %s17
        %s156 = ssub.s32 38, %s155
        %p157 = scmp.lt.s32.totalorder %s156, 32
        %s158 = scalar_select %p157, %s156, 32
        %s159 = smul.u32 128, %s158
        %p160 = scmp.lt.s32.totalorder %s155, 37
        %s161 = scalar_select %p160, %s155, 37
        %s162 = smul.addr %s161, 8
        %s163 = scalar_lea.vmem %s0, %s162
        %p164 = pneg %p38
        %p165 = pneg %p35
        %p166 = pneg %p59
        %p167 = pneg %p56
        %p168 = pneg %p80
        %p169 = pneg %p77
        %p170 = pneg %p106
        %p171 = pneg %p103
        %s172 = sand.u32 %s93, 1
        %s173 = scalar_lea.sflag [#allocation3], %s172
        %s174 = sand.u32 %s93, 1
        %s175 = smul.addr %s174, 16
        %s176 = scalar_lea.vmem [#allocation2], %s175
        %s177 = smul.u32 32, %s17
        %s178 = ssub.s32 38, %s177
        %p179 = scmp.lt.s32.totalorder %s178, 32
        %s180 = scalar_select %p179, %s178, 32
        %s181 = smul.u32 128, %s180
        %p182 = scmp.lt.s32.totalorder %s177, 37
        %s183 = scalar_select %p182, %s177, 37
        %s184 = smul.addr %s183, 8
        %s185 = scalar_lea.vmem %s0, %s184
        %s186 = smul.u32 32, %s17
        %s187 = ssub.s32 38, %s186
        %p188 = scmp.lt.s32.totalorder %s187, 32
        %s189 = scalar_select %p188, %s187, 32
        %s190 = smul.u32 128, %s189
        %s191 = smul.u32 2, %s17
        %s192 = ssub.s32 3, %s191
        %p193 = scmp.lt.s32.totalorder %s192, 2
        %s194 = scalar_select %p193, %s192, 2
        %s195 = smul.u32 128, %s194
        %v196 = vld [vmem:[%s1] sm:$0x3f]
        %v197 = vld [vmem:[%s185] sm:$0xff]
        %v198 = vld [vmem:[%s185 + $0x8] sm:$0xff]
        %v199 = vld [vmem:[%s185 + $0x10] sm:$0xff]
        %v200 = vld [vmem:[%s185 + $0x18] sm:$0xff]
        %v201 = vld [vmem:[%s185 + $0x20] sm:$0xff]
        %v202 = vld [vmem:[%s185 + $0x28] sm:$0xff]
        %v203 = vld [vmem:[%s185 + $0x30] sm:$0xff]
        %v204 = vld [vmem:[%s185 + $0x38] sm:$0xff]
        %v205 = vld [vmem:[%s185 + $0x40] sm:$0xff]
        %v206 = vld [vmem:[%s185 + $0x48] sm:$0xff]
        %v207 = vld [vmem:[%s185 + $0x50] sm:$0xff]
        %v208 = vld [vmem:[%s185 + $0x58] sm:$0xff]
        %v209 = vld [vmem:[%s185 + $0x60] sm:$0xff]
        %v210 = vld [vmem:[%s185 + $0x68] sm:$0xff]
        %v211 = vld [vmem:[%s185 + $0x70] sm:$0xff]
        %v212 = vld [vmem:[%s185 + $0x78] sm:$0xff]
        %v213 = vld [vmem:[%s185 + $0x80] sm:$0xff]
        %v214 = vld [vmem:[%s185 + $0x88] sm:$0xff]
        %v215 = vld [vmem:[%s185 + $0x90] sm:$0xff]
        %v216 = vld [vmem:[%s185 + $0x98] sm:$0xff]
        %v217 = vld [vmem:[%s185 + $0xa0] sm:$0xff]
        %v218 = vld [vmem:[%s185 + $0xa8] sm:$0xff]
        %v219 = vld [vmem:[%s185 + $0xb0] sm:$0xff]
        %v220 = vld [vmem:[%s185 + $0xb8] sm:$0xff]
        %v221 = vld [vmem:[%s185 + $0xc0] sm:$0xff]
        %v222 = vld [vmem:[%s185 + $0xc8] sm:$0xff]
        %v223 = vld [vmem:[%s185 + $0xd0] sm:$0xff]
        %v224 = vld [vmem:[%s185 + $0xd8] sm:$0xff]
        %v225 = vld [vmem:[%s185 + $0xe0] sm:$0xff]
        %v226 = vld [vmem:[%s185 + $0xe8] sm:$0xff]
        %v227 = vld [vmem:[%s185 + $0xf0] sm:$0xff]
        %v228 = vld [vmem:[%s185 + $0xf8] sm:$0xff]
        %v229 = vld [vmem:[%s2] sm:$0x3f]
        %231 = vset.pattern.permute.xlu0 0
        %232 = vperm.xlu0 %231, %v229
        %v233 = vpop.permute.xlu0 %232
        %vm235 = vcmask 130048
        %v237 = vsel %vm235, %v196, 0
        %v240 = vsel %vm235, %v197, 0
        %v243 = vsel %vm235, %v198, 0
        %v246 = vsel %vm235, %v199, 0
        %v249 = vsel %vm235, %v200, 0
        %v252 = vsel %vm235, %v201, 0
        %v255 = vsel %vm235, %v202, 0
        %v258 = vsel %vm235, %v203, 0
        %v261 = vsel %vm235, %v204, 0
        %v264 = vsel %vm235, %v205, 0
        %v267 = vsel %vm235, %v206, 0
        %v270 = vsel %vm235, %v207, 0
        %v273 = vsel %vm235, %v208, 0
        %v276 = vsel %vm235, %v209, 0
        %v279 = vsel %vm235, %v210, 0
        %v282 = vsel %vm235, %v211, 0
        %v285 = vsel %vm235, %v212, 0
        %v288 = vsel %vm235, %v213, 0
        %v291 = vsel %vm235, %v214, 0
        %v294 = vsel %vm235, %v215, 0
        %v297 = vsel %vm235, %v216, 0
        %v300 = vsel %vm235, %v217, 0
        %v303 = vsel %vm235, %v218, 0
        %v306 = vsel %vm235, %v219, 0
        %v309 = vsel %vm235, %v220, 0
        %v312 = vsel %vm235, %v221, 0
        %v315 = vsel %vm235, %v222, 0
        %v318 = vsel %vm235, %v223, 0
        %v321 = vsel %vm235, %v224, 0
        %v324 = vsel %vm235, %v225, 0
        %v327 = vsel %vm235, %v226, 0
        %v330 = vsel %vm235, %v227, 0
        %v333 = vsel %vm235, %v228, 0
        %335 = vmatprep.subr.mxu0 0.0
        %336 = vmatpush1.xpose.msra.mxu0 %v240
        %337 = vmatprep.subr.mxu0 0.0
        %338 = vmatpush1.xpose.msra.mxu0 %v243
        %339 = vmatprep.subr.mxu0 0.0
        %340 = vmatpush1.xpose.msra.mxu0 %v246
        %341 = vmatprep.subr.mxu0 0.0
        %342 = vmatpush1.xpose.msra.mxu0 %v249
        %343 = vmatprep.subr.mxu0 0.0
        %344 = vmatpush1.xpose.msra.mxu0 %v252
        %345 = vmatprep.subr.mxu0 0.0
        %346 = vmatpush1.xpose.msra.mxu0 %v255
        %347 = vmatprep.subr.mxu0 0.0
        %348 = vmatpush1.xpose.msra.mxu0 %v258
        %349 = vmatprep.subr.mxu0 0.0
        %350 = vmatpush1.xpose.msra.mxu0 %v261
        %351 = vmatprep.subr.mxu0 0.0
        %352 = vmatpush1.xpose.msra.mxu0 %v264
        %353 = vmatprep.subr.mxu0 0.0
        %354 = vmatpush1.xpose.msra.mxu0 %v267
        %355 = vmatprep.subr.mxu0 0.0
        %356 = vmatpush1.xpose.msra.mxu0 %v270
        %357 = vmatprep.subr.mxu0 0.0
        %358 = vmatpush1.xpose.msra.mxu0 %v273
        %359 = vmatprep.subr.mxu0 0.0
        %360 = vmatpush1.xpose.msra.mxu0 %v276
        %361 = vmatprep.subr.mxu0 0.0
        %362 = vmatpush1.xpose.msra.mxu0 %v279
        %363 = vmatprep.subr.mxu0 0.0
        %364 = vmatpush1.xpose.msra.mxu0 %v282
        %365 = vmatprep.subr.mxu0 0.0
        %366 = vmatpush1.xpose.msra.mxu0 %v285
        %367 = vmatprep.subr.mxu0 0.0
        %368 = vmatpush1.xpose.msra.mxu0 %v288
        %369 = vmatprep.subr.mxu0 0.0
        %370 = vmatpush1.xpose.msra.mxu0 %v291
        %371 = vmatprep.subr.mxu0 0.0
        %372 = vmatpush1.xpose.msra.mxu0 %v294
        %373 = vmatprep.subr.mxu0 0.0
        %374 = vmatpush1.xpose.msra.mxu0 %v297
        %375 = vmatprep.subr.mxu0 0.0
        %376 = vmatpush1.xpose.msra.mxu0 %v300
        %377 = vmatprep.subr.mxu0 0.0
        %378 = vmatpush1.xpose.msra.mxu0 %v303
        %379 = vmatprep.subr.mxu0 0.0
        %380 = vmatpush1.xpose.msra.mxu0 %v306
        %381 = vmatprep.subr.mxu0 0.0
        %382 = vmatpush1.xpose.msra.mxu0 %v309
        %383 = vmatprep.subr.mxu0 0.0
        %384 = vmatpush1.xpose.msra.mxu0 %v312
        %385 = vmatprep.subr.mxu0 0.0
        %386 = vmatpush1.xpose.msra.mxu0 %v315
        %387 = vmatprep.subr.mxu0 0.0
        %388 = vmatpush1.xpose.msra.mxu0 %v318
        %389 = vmatprep.subr.mxu0 0.0
        %390 = vmatpush1.xpose.msra.mxu0 %v321
        %391 = vmatprep.subr.mxu0 0.0
        %392 = vmatpush1.xpose.msra.mxu0 %v324
        %393 = vmatprep.subr.mxu0 0.0
        %394 = vmatpush1.xpose.msra.mxu0 %v327
        %395 = vmatprep.subr.mxu0 0.0
        %396 = vmatpush1.xpose.msra.mxu0 %v330
        %397 = vmatprep.subr.mxu0 0.0
        %398 = vmatpush1.xpose.msra.mxu0 %v333
        %399 = vmatprep.mubr.f32.mxu0 0.0
        %400 = vmatmul.mubr.f32.gmra.mrb[0].mxu0 %v237
        %v401 = vpop.f32.mrb[0].mxu0
        %v402 = vadd.f32 %v233, %v401
        %v403 = vpop.f32.mrb[0].mxu0
        %v404 = vadd.f32 %v233, %v403
        %405 = vdwg.mxu0
        %v408 = vcombine.low %v402, %v404
        %v410 = vunpack.c.l.s4 1966171168
        %v411 = vunpack.c.0.s8 %v410
        %v412 = vlaneseq
        %v413 = vshrl.u32 %v412, 7
        %v414 = vsub.s32 %v411, %v413
        %v415 = vrot.slane %v408, %v414
        %v417 = vunpack.c.l.s4 1966171168
        %v418 = vunpack.c.0.s8 %v417
        %v419 = vlaneseq
        %v420 = vshrl.u32 %v419, 7
        %v421 = vsub.s32 %v418, %v420
        %v422 = vrot.slane %v415, %v421
        %v424 = vlaneseq
        %vm425 = vcmp.ge.s32.totalorder %v424, 0
        %vm426 = vcmp.lt.s32.totalorder %v424, 256
        %vm427 = vmand %vm425, %vm426
        %428 = vst.msk [vmem:[%s176] ss:$8 sm:$0x3] %vm427, %v422
        %429 = vst.msk [vmem:[%s176] ss:$8 sm:$0x0] %vm427, %v422
        %v430 = vmul.f32 %v402, %v402
        %v431 = vmul.f32 %v404, %v404
        %v434 = vcombine.low %v430, %v431
        %v436 = vunpack.c.l.s4 1966171168
        %v437 = vunpack.c.0.s8 %v436
        %v438 = vlaneseq
        %v439 = vshrl.u32 %v438, 7
        %v440 = vsub.s32 %v437, %v439
        %v441 = vrot.slane %v434, %v440
        %v442 = vcombine.high %v441, %v441
        %v444 = vunpack.c.l.s4 1966171168
        %v445 = vunpack.c.0.s8 %v444
        %v446 = vlaneseq
        %v447 = vshrl.u32 %v446, 7
        %v448 = vsub.s32 %v445, %v447
        %v449 = vrot.slane %v442, %v448
        %s451 = scalar_lea.vmem %s176, 1 [#allocation2]
        %452 = vst.msk [vmem:[%s451] ss:$8 sm:$0x3] %vm427, %v449
        %453 = vst.msk [vmem:[%s451] ss:$8 sm:$0x0] %vm427, %v449
        %v454 = vand.u32 2147483647, %v402
        %vm455 = vcmp.le.f32.partialorder %v454, 0.7853982
        %vm456 = vcmp.lt.s32.totalorder %v402, 0
        %v457 = vand.u32 %v402, 2139095040
        %v458 = vshrl.u32 %v457, 23
        %v459 = vsub.s32 %v458, 127
        %v460 = vand.u32 2147483647, %v402
        %v461 = vand.u32 %v460, 8388607
        %v462 = vor.u32 %v461, 8388608
        %v463 = vsub.s32 0, %v462
        %v464 = vadd.s32 %v459, 1
        %vm465 = vcmp.gt.s32.totalorder %v464, 0
        %v466 = vsel %vm465, %v464, 0
        %v467 = vshrl.u32 %v466, 5
        %v468 = vand.u32 %v466, 31
        %v469 = vsub.s32 32, %v468
        %v470 = vshrl.u32 683565275, %v469
        %v471 = vshll.u32 683565275, %v468
        %v472 = vshrl.u32 2475754826, %v469
        %v473 = vor.u32 %v471, %v472
        %v474 = vshll.u32 2475754826, %v468
        %v475 = vshrl.u32 2131351028, %v469
        %v476 = vor.u32 %v474, %v475
        %v477 = vshll.u32 2131351028, %v468
        %v478 = vshrl.u32 2102212464, %v469
        %v479 = vor.u32 %v477, %v478
        %v480 = vshll.u32 2102212464, %v468
        %v481 = vshrl.u32 920167782, %v469
        %v482 = vor.u32 %v480, %v481
        %v483 = vshll.u32 920167782, %v468
        %v484 = vshrl.u32 1326507024, %v469
        %v485 = vor.u32 %v483, %v484
        %vm486 = vcmp.lt.s32.totalorder %v467, 1
        %vm487 = vcmp.lt.s32.totalorder %v467, 2
        %vm488 = vcmp.lt.s32.totalorder %v467, 3
        %vm489 = vcmp.lt.s32.totalorder %v467, 4
        %v490 = vsel %vm486, %v470, %v473
        %v491 = vsel %vm489, %v479, 2102212464
        %v492 = vsel %vm488, %v476, %v491
        %v493 = vsel %vm487, %v490, %v492
        %v494 = vsel %vm486, %v473, %v476
        %v495 = vsel %vm489, %v482, 920167782
        %v496 = vsel %vm488, %v479, %v495
        %v497 = vsel %vm487, %v494, %v496
        %v498 = vsel %vm486, %v476, %v479
        %v499 = vsel %vm489, %v485, 1326507024
        %v500 = vsel %vm488, %v482, %v499
        %v501 = vsel %vm487, %v498, %v500
        %v502 = vshll.u32 %v462, 8
        %v503 = vmul.u32.u64.compose %v502, %v501
        %v504 = vextract.low.u32 %v503
        %v505 = vextract.high.u32 %v503
        %v506 = vmul.u32.u64.compose %v502, %v497
        %v507 = vextract.low.u32 %v506
        %v508 = vextract.high.u32 %v506
        %v509 = vmul.u32 %v502, %v493
        %v510 = vadd.s32 %v505, %v507
        %vm511 = vc.u32 %v505, %v507
        %v512 = vadd.s32 %v508, 1
        %v513 = vsel %vm511, %v512, %v508
        %v514 = vadd.s32 %v509, %v513
        %v515 = vadd.s32 %v514, 536870912
        %v516 = vshrl.u32 %v515, 30
        %v517 = vshll.u32 %v516, 30
        %v518 = vsub.s32 %v514, %v517
        %vm519 = vcmp.lt.s32.totalorder %v518, 0
        %v520 = vsub.s32 0, %v518
        %v521 = vsel %vm519, %v520, %v518
        %v522 = vclz %v521
        %v523 = vsub.s32 %v522, 2
        %vm524 = vcmp.gt.s32.totalorder 0, %v523
        %v525 = vsel %vm524, 0, %v523
        %v526 = vsub.s32 32, %v525
        %v527 = vshll.u32 %v518, %v525
        %v528 = vshrl.u32 %v510, %v526
        %v529 = vor.u32 %v527, %v528
        %v530 = vsub.s32 4294967266, %v525
        %v531 = vadd.s32 %v530, 127
        %v532 = vshll.u32 %v531, 23
        %v533 = vor.u32 4788187, %v532
        %v534 = vand.u32 2147483647, %v533
        %v536 = vcvt.s32.f32 %v529
        %v537 = vmul.f32 %v536, %v534
        %v538 = vxor.u32 %v537, 2147483648
        %v539 = vsel %vm456, %v538, %v537
        %v540 = vsub.s32 4, %v516
        %v541 = vsel %vm456, %v540, %v516
        %v542 = vsel %vm455, %v402, %v539
        %v543 = vsel %vm455, 0, %v541
        %v544 = vcosq.f32.pop %v542
        %v545 = vsinq.f32.pop %v542
        %vm546 = vweird.f32 %v402
        %v547 = vadd.s32 %v543, 3
        %v548 = vand.u32 %v547, 3
        %vm549 = vcmp.lt.s32.totalorder %v548, 2
        %vm550 = vcmp.eq.s32.totalorder %v548, 0
        %v551 = vxor.u32 %v545, 2147483648
        %v552 = vsel %vm550, %v544, %v551
        %vm553 = vcmp.eq.s32.totalorder %v548, 2
        %v554 = vxor.u32 %v544, 2147483648
        %v555 = vsel %vm553, %v554, %v545
        %v556 = vsel %vm549, %v552, %v555
        %v557 = vsel %vm546, nan, %v556
        %v558 = vand.u32 2147483647, %v404
        %vm559 = vcmp.le.f32.partialorder %v558, 0.7853982
        %vm560 = vcmp.lt.s32.totalorder %v404, 0
        %v561 = vand.u32 %v404, 2139095040
        %v562 = vshrl.u32 %v561, 23
        %v563 = vsub.s32 %v562, 127
        %v564 = vand.u32 2147483647, %v404
        %v565 = vand.u32 %v564, 8388607
        %v566 = vor.u32 %v565, 8388608
        %v567 = vsub.s32 0, %v566
        %v568 = vadd.s32 %v563, 1
        %vm569 = vcmp.gt.s32.totalorder %v568, 0
        %v570 = vsel %vm569, %v568, 0
        %v571 = vshrl.u32 %v570, 5
        %v572 = vand.u32 %v570, 31
        %v573 = vsub.s32 32, %v572
        %v574 = vshrl.u32 683565275, %v573
        %v575 = vshll.u32 683565275, %v572
        %v576 = vshrl.u32 2475754826, %v573
        %v577 = vor.u32 %v575, %v576
        %v578 = vshll.u32 2475754826, %v572
        %v579 = vshrl.u32 2131351028, %v573
        %v580 = vor.u32 %v578, %v579
        %v581 = vshll.u32 2131351028, %v572
        %v582 = vshrl.u32 2102212464, %v573
        %v583 = vor.u32 %v581, %v582
        %v584 = vshll.u32 2102212464, %v572
        %v585 = vshrl.u32 920167782, %v573
        %v586 = vor.u32 %v584, %v585
        %v587 = vshll.u32 920167782, %v572
        %v588 = vshrl.u32 1326507024, %v573
        %v589 = vor.u32 %v587, %v588
        %vm590 = vcmp.lt.s32.totalorder %v571, 1
        %vm591 = vcmp.lt.s32.totalorder %v571, 2
        %vm592 = vcmp.lt.s32.totalorder %v571, 3
        %vm593 = vcmp.lt.s32.totalorder %v571, 4
        %v594 = vsel %vm590, %v574, %v577
        %v595 = vsel %vm593, %v583, 2102212464
        %v596 = vsel %vm592, %v580, %v595
        %v597 = vsel %vm591, %v594, %v596
        %v598 = vsel %vm590, %v577, %v580
        %v599 = vsel %vm593, %v586, 920167782
        %v600 = vsel %vm592, %v583, %v599
        %v601 = vsel %vm591, %v598, %v600
        %v602 = vsel %vm590, %v580, %v583
        %v603 = vsel %vm593, %v589, 1326507024
        %v604 = vsel %vm592, %v586, %v603
        %v605 = vsel %vm591, %v602, %v604
        %v606 = vshll.u32 %v566, 8
        %v607 = vmul.u32.u64.compose %v606, %v605
        %v608 = vextract.low.u32 %v607
        %v609 = vextract.high.u32 %v607
        %v610 = vmul.u32.u64.compose %v606, %v601
        %v611 = vextract.low.u32 %v610
        %v612 = vextract.high.u32 %v610
        %v613 = vmul.u32 %v606, %v597
        %v614 = vadd.s32 %v609, %v611
        %vm615 = vc.u32 %v609, %v611
        %v616 = vadd.s32 %v612, 1
        %v617 = vsel %vm615, %v616, %v612
        %v618 = vadd.s32 %v613, %v617
        %v619 = vadd.s32 %v618, 536870912
        %v620 = vshrl.u32 %v619, 30
        %v621 = vshll.u32 %v620, 30
        %v622 = vsub.s32 %v618, %v621
        %vm623 = vcmp.lt.s32.totalorder %v622, 0
        %v624 = vsub.s32 0, %v622
        %v625 = vsel %vm623, %v624, %v622
        %v626 = vclz %v625
        %v627 = vsub.s32 %v626, 2
        %vm628 = vcmp.gt.s32.totalorder 0, %v627
        %v629 = vsel %vm628, 0, %v627
        %v630 = vsub.s32 32, %v629
        %v631 = vshll.u32 %v622, %v629
        %v632 = vshrl.u32 %v614, %v630
        %v633 = vor.u32 %v631, %v632
        %v634 = vsub.s32 4294967266, %v629
        %v635 = vadd.s32 %v634, 127
        %v636 = vshll.u32 %v635, 23
        %v637 = vor.u32 4788187, %v636
        %v638 = vand.u32 2147483647, %v637
        %v640 = vcvt.s32.f32 %v633
        %v641 = vmul.f32 %v640, %v638
        %v642 = vxor.u32 %v641, 2147483648
        %v643 = vsel %vm560, %v642, %v641
        %v644 = vsub.s32 4, %v620
        %v645 = vsel %vm560, %v644, %v620
        %v646 = vsel %vm559, %v404, %v643
        %v647 = vsel %vm559, 0, %v645
        %v648 = vcosq.f32.pop %v646
        %v649 = vsinq.f32.pop %v646
        %vm650 = vweird.f32 %v404
        %v651 = vadd.s32 %v647, 3
        %v652 = vand.u32 %v651, 3
        %vm653 = vcmp.lt.s32.totalorder %v652, 2
        %vm654 = vcmp.eq.s32.totalorder %v652, 0
        %v655 = vxor.u32 %v649, 2147483648
        %v656 = vsel %vm654, %v648, %v655
        %vm657 = vcmp.eq.s32.totalorder %v652, 2
        %v658 = vxor.u32 %v648, 2147483648
        %v659 = vsel %vm657, %v658, %v649
        %v660 = vsel %vm653, %v656, %v659
        %v661 = vsel %vm650, nan, %v660
        %v664 = vcombine.low %v557, %v661
        %v666 = vunpack.c.l.s4 1966171168
        %v667 = vunpack.c.0.s8 %v666
        %v668 = vlaneseq
        %v669 = vshrl.u32 %v668, 7
        %v670 = vsub.s32 %v667, %v669
        %v671 = vrot.slane %v664, %v670
        %v673 = vunpack.c.l.s4 1966171168
        %v674 = vunpack.c.0.s8 %v673
        %v675 = vlaneseq
        %v676 = vshrl.u32 %v675, 7
        %v677 = vsub.s32 %v674, %v676
        %v678 = vrot.slane %v671, %v677
        %v679 = vcombine.high %v678, %v678
        %s681 = scalar_lea.vmem %s176, 2 [#allocation2]
        %682 = vst.msk [vmem:[%s681] ss:$8 sm:$0x3] %vm427, %v679
        %683 = vst.msk [vmem:[%s681] ss:$8 sm:$0x0] %vm427, %v679
        %v684 = vsub.f32 0.0, %v402
        %v685 = vsub.f32 0.0, %v404
        %v686 = vmul.f32 %v684, 1.442695
        %v687 = vpow.pop %v686
        %v688 = vmul.f32 %v685, 1.442695
        %v689 = vpow.pop %v688
        %v690 = vadd.f32 %v687, 1.0
        %v691 = vadd.f32 %v689, 1.0
        %v692 = vrcp.pop %v690
        %v693 = vmul.f32 1.0, %v692
        %v694 = vrcp.pop %v691
        %v695 = vmul.f32 1.0, %v694
        %v698 = vcombine.low %v693, %v695
        %v700 = vunpack.c.l.s4 1966171168
        %v701 = vunpack.c.0.s8 %v700
        %v702 = vlaneseq
        %v703 = vshrl.u32 %v702, 7
        %v704 = vsub.s32 %v701, %v703
        %v705 = vrot.slane %v698, %v704
        %v706 = vcombine.high %v705, %v705
        %v708 = vunpack.c.l.s4 1966171168
        %v709 = vunpack.c.0.s8 %v708
        %v710 = vlaneseq
        %v711 = vshrl.u32 %v710, 7
        %v712 = vsub.s32 %v709, %v711
        %v713 = vrot.slane %v706, %v712
        %v714 = vcombine.high %v713, %v713
        %s716 = scalar_lea.vmem %s176, 3 [#allocation2]
        %717 = vst.msk [vmem:[%s716] ss:$8 sm:$0x3] %vm427, %v714
        %718 = vst.msk [vmem:[%s716] ss:$8 sm:$0x0] %vm427, %v714
        %v719 = vrot.slane %v402, 1
        %v720 = vrot.slane %v404, 1
        %v723 = vmul.f32 %v402, %v719
        %v724 = vmul.f32 %v404, %v720
        %v727 = vcombine.high %v723, %v724
        %v729 = vunpack.c.l.s4 1966171168
        %v730 = vunpack.c.0.s8 %v729
        %v731 = vlaneseq
        %v732 = vshrl.u32 %v731, 7
        %v733 = vsub.s32 %v730, %v732
        %v734 = vrot.slane %v727, %v733
        %v736 = vunpack.c.l.s4 1966171168
        %v737 = vunpack.c.0.s8 %v736
        %v738 = vlaneseq
        %v739 = vshrl.u32 %v738, 7
        %v740 = vsub.s32 %v737, %v739
        %v741 = vrot.slane %v734, %v740
        %s743 = scalar_lea.vmem %s176, 4 [#allocation2]
        %744 = vst.msk [vmem:[%s743] ss:$8 sm:$0x3] %vm427, %v741
        %745 = vst.msk [vmem:[%s743] ss:$8 sm:$0x0] %vm427, %v741
        %s746 = sand.u32 %s93, 1
        %s747 = scalar_lea.sflag [#allocation3], %s746
        %s748 = sand.u32 %s93, 1
        %s749 = smul.addr %s748, 16
        %s750 = scalar_lea.vmem [#allocation2], %s749
        // Predicated region
        $region33: #{tpu_custom_call.1} parent=31 // pred_check
          %p751 = pneg %p103
        $region34: #{tpu_custom_call.1} parent=31 // pred_check_branch
          %753 = sbr.rel (%p751) target = $region36
        $region35: #{tpu_custom_call.1} parent=31 // pred_region
          %s754 = smul.u32 2, %s17
          %s755 = ssub.s32 3, %s754
          %p756 = scmp.lt.s32.totalorder %s755, 2
          %s757 = scalar_select %p756, %s755, 2
          %s758 = smul.u32 128, %s757
          %s760 = ssub.s32 256, %s758
          %761 = vsyncadd %s747, %s760
          %p762 = scmp.ne.s32.totalorder 0, %s758
          %s763 = smul.addr %s754, 128
          %s764 = scalar_lea.hbm %s3, %s763
          %s765 = smul.u32 %s757, 8
          %s766 = sshll.u32 %s765, 4
          %s767 = sshll.u32 %s750, 4
          %s768 = int_to_ptr.vmem [resolvable:$true] %s767
          %770 = dma.vmem_to_hbm [thread:$0]  (%p762), %s768, %s766, %s764, %s747
        $region36: #{tpu_custom_call.1} parent=31 // pred_fallthru
          _
      $region32: #{tpu_custom_call.1} parent=5 // pred_fallthru
        _
      %p771 = scmp.le.s32.totalorder 2, %s12
      // Predicated region
      $region37: #{tpu_custom_call.1} parent=5 // pred_check
        %p772 = pneg %p771
      $region38: #{tpu_custom_call.1} parent=5 // pred_check_branch
        %774 = sbr.rel (%p772) target = $region40
      $region39: #{tpu_custom_call.1} parent=5 // pred_region
        %s775 = ssub.s32 %s12, 2
        // Predicated region
        $region41: #{tpu_custom_call.1} parent=39 // pred_check
          %p776 = pneg %p109
        $region42: #{tpu_custom_call.1} parent=39 // pred_check_branch
          %778 = sbr.rel (%p776) target = $region44
        $region43: #{tpu_custom_call.1} parent=39 // pred_region
          %s779 = sand.u32 %s94, 1
          %s780 = scalar_lea.sflag [#allocation3], %s779
          %s781 = sand.u32 %s94, 1
          %s782 = smul.addr %s781, 16
          %s783 = scalar_lea.vmem [#allocation2], %s782
          %784 = dma.done %s780, 256
        $region44: #{tpu_custom_call.1} parent=39 // pred_fallthru
          _
      $region40: #{tpu_custom_call.1} parent=5 // pred_fallthru
        _
    $region6: #{tpu_custom_call.1} parent=1 // loop_footer
      %s16 = sadd.s32 1, %s12
    $region7: #{tpu_custom_call.1} parent=1 // loop_footer_branch
      %11 = sbr.rel target = $region3
    $region8: #{tpu_custom_call.1} parent=1 // loop_exit
      _
    %785 = vsyncpa [#allocation3], 1
    %s786 = scalar_lea.sflag [#allocation3], 1
    %787 = vsyncpa %s786, 1

</llo_original>
